<compile_context>
chip_gen: v7x
topology: tpu7x:2x2x1
jax: 0.10.0
libtpu: 0.0.40
codegen_flags: <defaults>
</compile_context>

<pallas_src>
import functools

import jax
import jax.numpy as jnp
from jax.experimental import pallas as pl
from jax.experimental.pallas import tpu as pltpu


_INV_SQRT2 = 0.7071067811865476
_SQRT_2_OVER_PI = 0.7978845608028654


def _erf_f32(x):
    """f32-accurate erf (A&S 7.1.26, |err| <= 1.5e-7).

    The divide goes to the EUP via pl.reciprocal(approx=True); one Newton step
    restores full f32 accuracy so exact-GELU semantics are preserved.
    """
    a1, a2, a3, a4, a5 = (0.254829592, -0.284496736, 1.421413741,
                          -1.453152027, 1.061405429)
    p = 0.3275911
    ax = jnp.abs(x)
    d = 1.0 + p * ax
    recip = getattr(pl, "reciprocal", None)
    if recip is not None:
        t = recip(d, approx=True)
        t = t * (2.0 - d * t)            # one Newton refinement (2 VALU ops)
    else:                                # fallback for older Pallas
        t = 1.0 / d
    poly = ((((a5 * t + a4) * t + a3) * t + a2) * t + a1) * t
    y = 1.0 - poly * jnp.exp(-ax * ax)
    return jnp.where(x < 0, -y, y)


def _gelu(x, use_tanh):
    if use_tanh:
        # tanh-approximate GELU: single EUP tanh, ~1e-3 abs deviation from exact.
        return 0.5 * x * (1.0 + jnp.tanh(
            _SQRT_2_OVER_PI * (x + 0.044715 * (x * x * x))))
    # exact (erf-based) GELU, matching PyTorch nn.GELU() default
    return 0.5 * x * (1.0 + _erf_f32(x * _INV_SQRT2))


def _inner_patch_embed_kernel(x_ref, w_ref, shift_ref, o_ref, *, use_tanh_gelu):
    # x_ref:     (1, 1, 4*(THo+1), Wo+1, E)  space-to-depth input tile (+1-row halo)
    #            rows [q*(THo+1) : (q+1)*(THo+1)) hold quadrant q = 2*dy + dx
    # w_ref:     (9, E)  per-tap grouped-conv weights with BN scale folded (f32)
    # shift_ref: (1, E)  folded conv-bias + BN shift (f32)
    # o_ref:     (1, THo, Wo, E)
    THo, Wo, _ = o_ref.shape[1], o_ref.shape[2], o_ref.shape[3]

    acc = None
    for kh in range(3):
        for kw in range(3):
            q = (kh % 2) * 2 + (kw % 2)      # space-to-depth quadrant
            dy, dx = kh // 2, kw // 2        # offset inside that quadrant
            r0 = q * (THo + 1) + dy
            tap = x_ref[0, 0, r0:r0 + THo, dx:dx + Wo, :].astype(jnp.float32)
            term = tap * w_ref[kh * 3 + kw]  # (THo,Wo,E) * (E,)  -> VPU MAC
            acc = term if acc is None else acc + term
    y = acc + shift_ref[0]
    o_ref[0] = _gelu(y, use_tanh_gelu).astype(o_ref.dtype)


def inner_patch_embed(x, H, W, params, down_sample=True, *,
                      tile_rows=None, use_tanh_gelu=False):
    """x: (B, N, C) with N == H*W. Returns (B, Ho*Wo, E) (matches PyTorch)."""
    if not down_sample:
        return x
    w_conv, b_conv, gamma, beta, r_mean, r_var, eps = params
    B, N, C = x.shape
    assert N == H * W
    E = w_conv.shape[0]
    assert E % C == 0
    m = E // C
    Ho, Wo = (H + 1) // 2, (W + 1) // 2
    itemsize = x.dtype.itemsize

    # ---- output-row tile size (bounded VMEM; >=2 parallel grid steps) -------
    if tile_rows is None:
        bytes_per_out_row = 4 * (Wo + 1) * E * itemsize
        tile_rows = max(1, min(Ho, (2 << 20) // max(1, bytes_per_out_row)))
    THo = int(tile_rows)
    T = -(-Ho // THo)

    # ---- glue (layout only, no 9x duplication) ------------------------------
    # Grouped conv: output channel e reads input channel e // m.  Expand the
    # channels once here so the kernel is a pure lane-dense VPU MAC (no
    # in-kernel lane gather).  No-op when m == 1 (true depthwise).
    x_img = x.reshape(B, H, W, C)
    if m > 1:
        x_img = jnp.repeat(x_img, m, axis=-1)                     # (B,H,W,E)

    Hp = 2 * T * THo + 2          # >= H + 2 (conv pad 1 + tile rounding)
    Wp = 2 * Wo + 2               # >= W + 2
    x_pad = jnp.pad(x_img, ((0, 0), (1, Hp - 1 - H), (1, Wp - 1 - W), (0, 0)))

    # space-to-depth by 2: padded (r, c) = (2*i + dy, 2*j + dx), quadrant 2*dy+dx
    I = T * THo + 1
    x_s2d = x_pad.reshape(B, I, 2, Wo + 1, 2, E)
    x_s2d = x_s2d.transpose(0, 2, 4, 1, 3, 5).reshape(B, 4, I, Wo + 1, E)

    # row tiles with a +1-row halo (duplication factor only (THo+1)/THo)
    x_tiles = jnp.stack(
        [x_s2d[:, :, t * THo:t * THo + THo + 1] for t in range(T)], axis=1)
    x_tiles = x_tiles.reshape(B, T, 4 * (THo + 1), Wo + 1, E)

    # ---- fold conv bias + eval-mode BN into per-tap weights / shift (f32) ---
    scale = (gamma / jnp.sqrt(r_var + eps)).astype(jnp.float32)             # (E,)
    w_eff = w_conv.reshape(E, 9).T.astype(jnp.float32) * scale[None, :]     # (9,E)
    shift = (((b_conv - r_mean) * scale + beta).astype(jnp.float32))[None, :]

    # ---- VMEM budget (explicit; re-derived from the chosen tile) ------------
    in_tile = 4 * (THo + 1) * (Wo + 1) * E * itemsize
    out_tile = THo * Wo * E * itemsize
    acc_bytes = THo * Wo * E * 4
    vmem_limit = int(2 * (in_tile + out_tile) + 4 * acc_bytes
                     + 2 * (w_eff.size + shift.size) * 4 + (8 << 20))
    vmem_limit = max(16 << 20, min(vmem_limit, 100 << 20))

    kernel = functools.partial(_inner_patch_embed_kernel,
                               use_tanh_gelu=use_tanh_gelu)
    out = pl.pallas_call(
        kernel,
        out_shape=jax.ShapeDtypeStruct((B, T * THo, Wo, E), x.dtype),
        grid_spec=pltpu.PrefetchScalarGridSpec(
            num_scalar_prefetch=0,
            grid=(B, T),
            in_specs=[
                pl.BlockSpec((1, 1, 4 * (THo + 1), Wo + 1, E),
                             lambda b, t: (b, t, 0, 0, 0)),
                pl.BlockSpec((9, E), lambda b, t: (0, 0)),
                pl.BlockSpec((1, E), lambda b, t: (0, 0)),
            ],
            out_specs=pl.BlockSpec((1, THo, Wo, E), lambda b, t: (b, t, 0, 0)),
        ),
        compiler_params=pltpu.CompilerParams(
            dimension_semantics=("parallel", "parallel"),
            vmem_limit_bytes=vmem_limit),
    )(x_tiles, w_eff, shift)

    return out[:, :Ho].reshape(B, Ho * Wo, E)


def reference(x, H, W, params):
    """Pure-JAX reference mirroring the PyTorch forward (eval-mode BN, exact GELU)."""
    w_conv, b_conv, gamma, beta, r_mean, r_var, eps = params
    B, N, C = x.shape
    E = w_conv.shape[0]
    x_nchw = jnp.transpose(x, (0, 2, 1)).reshape(B, C, H, W)
    y = jax.lax.conv_general_dilated(
        x_nchw, w_conv, window_strides=(2, 2), padding=((1, 1), (1, 1)),
        dimension_numbers=("NCHW", "OIHW", "NCHW"), feature_group_count=C)
    y = y + b_conv[None, :, None, None]
    y = (y - r_mean[None, :, None, None]) / jnp.sqrt(
        r_var[None, :, None, None] + eps) * gamma[None, :, None, None] \
        + beta[None, :, None, None]
    y = 0.5 * y * (1.0 + jax.scipy.special.erf(y / jnp.sqrt(2.0)))
    Ho, Wo = y.shape[2], y.shape[3]
    return jnp.transpose(y.reshape(B, E, Ho * Wo), (0, 2, 1))


if __name__ == "__main__":
    # InnerPatchEmbed(input_dim=64, embed_dim=128, down_sample=True)
    # (E = 128 keeps the output stores lane-dense; C:E ratio matches HLG stages)
    B, C, H, W, E = 2, 64, 16, 16, 128
    key = jax.random.PRNGKey(0)
    ks = jax.random.split(key, 7)
    x = jax.random.normal(ks[0], (B, H * W, C), jnp.float32)

    # deterministic synthetic parameters (shapes from the module __init__)
    w_conv = 0.1 * jax.random.normal(ks[1], (E, 1, 3, 3), jnp.float32)  # groups=C
    b_conv = 0.1 * jax.random.normal(ks[2], (E,), jnp.float32)
    gamma = 1.0 + 0.1 * jax.random.normal(ks[3], (E,), jnp.float32)
    beta = 0.1 * jax.random.normal(ks[4], (E,), jnp.float32)
    r_mean = 0.1 * jax.random.normal(ks[5], (E,), jnp.float32)
    r_var = 1.0 + 0.1 * jnp.abs(jax.random.normal(ks[6], (E,), jnp.float32))
    eps = 1e-5
    params = (w_conv, b_conv, gamma, beta, r_mean, r_var, eps)

    # tile_rows=4 -> grid (B=2, T=2): 4 parallel steps, row-tiled output.
    out = inner_patch_embed(x, H, W, params, down_sample=True, tile_rows=4)
    out = jax.block_until_ready(out)

    ref = reference(x, H, W, params)
    Ho, Wo = (H + 1) // 2, (W + 1) // 2
    assert out.shape == (B, Ho * Wo, E), out.shape
    if not bool(jnp.allclose(out, ref, atol=1e-3, rtol=1e-3)):
        raise SystemExit(
            f"mismatch: max abs err {float(jnp.max(jnp.abs(out - ref)))}")
    print("KERNEL_OK")
</pallas_src>

<mosaic_0001>
module attributes {stable_mosaic.version = 11 : i64} {
  func.func @_inner_patch_embed_kernel(%arg0: i32, %arg1: i32, %arg2: memref<1x1x20x9x128xf32, #tpu.memory_space<vmem>>, %arg3: memref<9x128xf32, #tpu.memory_space<vmem>>, %arg4: memref<1x128xf32, #tpu.memory_space<vmem>>, %arg5: memref<1x4x8x128xf32, #tpu.memory_space<vmem>>) attributes {dimension_semantics = [#tpu.dimension_semantics<parallel>, #tpu.dimension_semantics<parallel>], iteration_bounds = array<i64: 2, 2>, scalar_prefetch = 0 : i64, scratch_operands = 0 : i64, tpu.core_type = #tpu.core_type<tc>, window_params = [{transform_indices = @transform_0, window_bounds = array<i64: 1, 1, 20, 9, 128>}, {pipeline_mode = #tpu.pipeline_mode<synchronous>, transform_indices = @transform_1, window_bounds = array<i64: 9, 128>}, {pipeline_mode = #tpu.pipeline_mode<synchronous>, transform_indices = @transform_2, window_bounds = array<i64: 1, 128>}, {transform_indices = @transform_3, window_bounds = array<i64: 1, 4, 8, 128>}]} {
    %c0 = arith.constant 0 : index
    %c0_0 = arith.constant 0 : index
    %c0_1 = arith.constant 0 : index
    %c0_2 = arith.constant 0 : index
    %c0_3 = arith.constant 0 : index
    %0 = vector.load %arg2[%c0, %c0_0, %c0_1, %c0_2, %c0_3] : memref<1x1x20x9x128xf32, #tpu.memory_space<vmem>>, vector<1x1x4x8x128xf32>
    %1 = vector.shape_cast %0 : vector<1x1x4x8x128xf32> to vector<4x8x128xf32>
    %c0_4 = arith.constant 0 : index
    %c0_5 = arith.constant 0 : index
    %2 = vector.load %arg3[%c0_4, %c0_5] : memref<9x128xf32, #tpu.memory_space<vmem>>, vector<1x128xf32>
    %3 = vector.shape_cast %2 : vector<1x128xf32> to vector<128xf32>
    %4 = vector.shape_cast %3 : vector<128xf32> to vector<1x1x128xf32>
    %5 = vector.broadcast %4 : vector<1x1x128xf32> to vector<4x8x128xf32>
    %6 = arith.mulf %1, %5 : vector<4x8x128xf32>
    %c0_6 = arith.constant 0 : index
    %c0_7 = arith.constant 0 : index
    %c5 = arith.constant 5 : index
    %c0_8 = arith.constant 0 : index
    %c0_9 = arith.constant 0 : index
    %7 = vector.load %arg2[%c0_6, %c0_7, %c5, %c0_8, %c0_9] : memref<1x1x20x9x128xf32, #tpu.memory_space<vmem>>, vector<1x1x4x8x128xf32>
    %8 = vector.shape_cast %7 : vector<1x1x4x8x128xf32> to vector<4x8x128xf32>
    %c1 = arith.constant 1 : index
    %c0_10 = arith.constant 0 : index
    %9 = vector.load %arg3[%c1, %c0_10] : memref<9x128xf32, #tpu.memory_space<vmem>>, vector<1x128xf32>
    %10 = vector.shape_cast %9 : vector<1x128xf32> to vector<128xf32>
    %11 = vector.shape_cast %10 : vector<128xf32> to vector<1x1x128xf32>
    %12 = vector.broadcast %11 : vector<1x1x128xf32> to vector<4x8x128xf32>
    %13 = arith.mulf %8, %12 : vector<4x8x128xf32>
    %14 = arith.addf %6, %13 : vector<4x8x128xf32>
    %c0_11 = arith.constant 0 : index
    %c0_12 = arith.constant 0 : index
    %c0_13 = arith.constant 0 : index
    %c1_14 = arith.constant 1 : index
    %c0_15 = arith.constant 0 : index
    %15 = vector.load %arg2[%c0_11, %c0_12, %c0_13, %c1_14, %c0_15] : memref<1x1x20x9x128xf32, #tpu.memory_space<vmem>>, vector<1x1x4x8x128xf32>
    %16 = vector.shape_cast %15 : vector<1x1x4x8x128xf32> to vector<4x8x128xf32>
    %c2 = arith.constant 2 : index
    %c0_16 = arith.constant 0 : index
    %17 = vector.load %arg3[%c2, %c0_16] : memref<9x128xf32, #tpu.memory_space<vmem>>, vector<1x128xf32>
    %18 = vector.shape_cast %17 : vector<1x128xf32> to vector<128xf32>
    %19 = vector.shape_cast %18 : vector<128xf32> to vector<1x1x128xf32>
    %20 = vector.broadcast %19 : vector<1x1x128xf32> to vector<4x8x128xf32>
    %21 = arith.mulf %16, %20 : vector<4x8x128xf32>
    %22 = arith.addf %14, %21 : vector<4x8x128xf32>
    %c0_17 = arith.constant 0 : index
    %c0_18 = arith.constant 0 : index
    %c10 = arith.constant 10 : index
    %c0_19 = arith.constant 0 : index
    %c0_20 = arith.constant 0 : index
    %23 = vector.load %arg2[%c0_17, %c0_18, %c10, %c0_19, %c0_20] : memref<1x1x20x9x128xf32, #tpu.memory_space<vmem>>, vector<1x1x4x8x128xf32>
    %24 = vector.shape_cast %23 : vector<1x1x4x8x128xf32> to vector<4x8x128xf32>
    %c3 = arith.constant 3 : index
    %c0_21 = arith.constant 0 : index
    %25 = vector.load %arg3[%c3, %c0_21] : memref<9x128xf32, #tpu.memory_space<vmem>>, vector<1x128xf32>
    %26 = vector.shape_cast %25 : vector<1x128xf32> to vector<128xf32>
    %27 = vector.shape_cast %26 : vector<128xf32> to vector<1x1x128xf32>
    %28 = vector.broadcast %27 : vector<1x1x128xf32> to vector<4x8x128xf32>
    %29 = arith.mulf %24, %28 : vector<4x8x128xf32>
    %30 = arith.addf %22, %29 : vector<4x8x128xf32>
    %c0_22 = arith.constant 0 : index
    %c0_23 = arith.constant 0 : index
    %c15 = arith.constant 15 : index
    %c0_24 = arith.constant 0 : index
    %c0_25 = arith.constant 0 : index
    %31 = vector.load %arg2[%c0_22, %c0_23, %c15, %c0_24, %c0_25] : memref<1x1x20x9x128xf32, #tpu.memory_space<vmem>>, vector<1x1x4x8x128xf32>
    %32 = vector.shape_cast %31 : vector<1x1x4x8x128xf32> to vector<4x8x128xf32>
    %c4 = arith.constant 4 : index
    %c0_26 = arith.constant 0 : index
    %33 = vector.load %arg3[%c4, %c0_26] : memref<9x128xf32, #tpu.memory_space<vmem>>, vector<1x128xf32>
    %34 = vector.shape_cast %33 : vector<1x128xf32> to vector<128xf32>
    %35 = vector.shape_cast %34 : vector<128xf32> to vector<1x1x128xf32>
    %36 = vector.broadcast %35 : vector<1x1x128xf32> to vector<4x8x128xf32>
    %37 = arith.mulf %32, %36 : vector<4x8x128xf32>
    %38 = arith.addf %30, %37 : vector<4x8x128xf32>
    %c0_27 = arith.constant 0 : index
    %c0_28 = arith.constant 0 : index
    %c10_29 = arith.constant 10 : index
    %c1_30 = arith.constant 1 : index
    %c0_31 = arith.constant 0 : index
    %39 = vector.load %arg2[%c0_27, %c0_28, %c10_29, %c1_30, %c0_31] : memref<1x1x20x9x128xf32, #tpu.memory_space<vmem>>, vector<1x1x4x8x128xf32>
    %40 = vector.shape_cast %39 : vector<1x1x4x8x128xf32> to vector<4x8x128xf32>
    %c5_32 = arith.constant 5 : index
    %c0_33 = arith.constant 0 : index
    %41 = vector.load %arg3[%c5_32, %c0_33] : memref<9x128xf32, #tpu.memory_space<vmem>>, vector<1x128xf32>
    %42 = vector.shape_cast %41 : vector<1x128xf32> to vector<128xf32>
    %43 = vector.shape_cast %42 : vector<128xf32> to vector<1x1x128xf32>
    %44 = vector.broadcast %43 : vector<1x1x128xf32> to vector<4x8x128xf32>
    %45 = arith.mulf %40, %44 : vector<4x8x128xf32>
    %46 = arith.addf %38, %45 : vector<4x8x128xf32>
    %c0_34 = arith.constant 0 : index
    %c0_35 = arith.constant 0 : index
    %c1_36 = arith.constant 1 : index
    %c0_37 = arith.constant 0 : index
    %c0_38 = arith.constant 0 : index
    %47 = vector.load %arg2[%c0_34, %c0_35, %c1_36, %c0_37, %c0_38] : memref<1x1x20x9x128xf32, #tpu.memory_space<vmem>>, vector<1x1x4x8x128xf32>
    %48 = vector.shape_cast %47 : vector<1x1x4x8x128xf32> to vector<4x8x128xf32>
    %c6 = arith.constant 6 : index
    %c0_39 = arith.constant 0 : index
    %49 = vector.load %arg3[%c6, %c0_39] : memref<9x128xf32, #tpu.memory_space<vmem>>, vector<1x128xf32>
    %50 = vector.shape_cast %49 : vector<1x128xf32> to vector<128xf32>
    %51 = vector.shape_cast %50 : vector<128xf32> to vector<1x1x128xf32>
    %52 = vector.broadcast %51 : vector<1x1x128xf32> to vector<4x8x128xf32>
    %53 = arith.mulf %48, %52 : vector<4x8x128xf32>
    %54 = arith.addf %46, %53 : vector<4x8x128xf32>
    %c0_40 = arith.constant 0 : index
    %c0_41 = arith.constant 0 : index
    %c6_42 = arith.constant 6 : index
    %c0_43 = arith.constant 0 : index
    %c0_44 = arith.constant 0 : index
    %55 = vector.load %arg2[%c0_40, %c0_41, %c6_42, %c0_43, %c0_44] : memref<1x1x20x9x128xf32, #tpu.memory_space<vmem>>, vector<1x1x4x8x128xf32>
    %56 = vector.shape_cast %55 : vector<1x1x4x8x128xf32> to vector<4x8x128xf32>
    %c7 = arith.constant 7 : index
    %c0_45 = arith.constant 0 : index
    %57 = vector.load %arg3[%c7, %c0_45] : memref<9x128xf32, #tpu.memory_space<vmem>>, vector<1x128xf32>
    %58 = vector.shape_cast %57 : vector<1x128xf32> to vector<128xf32>
    %59 = vector.shape_cast %58 : vector<128xf32> to vector<1x1x128xf32>
    %60 = vector.broadcast %59 : vector<1x1x128xf32> to vector<4x8x128xf32>
    %61 = arith.mulf %56, %60 : vector<4x8x128xf32>
    %62 = arith.addf %54, %61 : vector<4x8x128xf32>
    %c0_46 = arith.constant 0 : index
    %c0_47 = arith.constant 0 : index
    %c1_48 = arith.constant 1 : index
    %c1_49 = arith.constant 1 : index
    %c0_50 = arith.constant 0 : index
    %63 = vector.load %arg2[%c0_46, %c0_47, %c1_48, %c1_49, %c0_50] : memref<1x1x20x9x128xf32, #tpu.memory_space<vmem>>, vector<1x1x4x8x128xf32>
    %64 = vector.shape_cast %63 : vector<1x1x4x8x128xf32> to vector<4x8x128xf32>
    %c8 = arith.constant 8 : index
    %c0_51 = arith.constant 0 : index
    %65 = vector.load %arg3[%c8, %c0_51] : memref<9x128xf32, #tpu.memory_space<vmem>>, vector<1x128xf32>
    %66 = vector.shape_cast %65 : vector<1x128xf32> to vector<128xf32>
    %67 = vector.shape_cast %66 : vector<128xf32> to vector<1x1x128xf32>
    %68 = vector.broadcast %67 : vector<1x1x128xf32> to vector<4x8x128xf32>
    %69 = arith.mulf %64, %68 : vector<4x8x128xf32>
    %70 = arith.addf %62, %69 : vector<4x8x128xf32>
    %c0_52 = arith.constant 0 : index
    %c0_53 = arith.constant 0 : index
    %71 = vector.load %arg4[%c0_52, %c0_53] : memref<1x128xf32, #tpu.memory_space<vmem>>, vector<1x128xf32>
    %72 = vector.shape_cast %71 : vector<1x128xf32> to vector<128xf32>
    %73 = vector.shape_cast %72 : vector<128xf32> to vector<1x1x128xf32>
    %74 = vector.broadcast %73 : vector<1x1x128xf32> to vector<4x8x128xf32>
    %75 = arith.addf %70, %74 : vector<4x8x128xf32>
    %cst = arith.constant 5.000000e-01 : f32
    %76 = vector.broadcast %cst : f32 to vector<4x8x128xf32>
    %77 = arith.mulf %76, %75 : vector<4x8x128xf32>
    %cst_54 = arith.constant 0.707106769 : f32
    %78 = vector.broadcast %cst_54 : f32 to vector<4x8x128xf32>
    %79 = arith.mulf %75, %78 : vector<4x8x128xf32>
    %80 = math.absf %79 : vector<4x8x128xf32>
    %cst_55 = arith.constant 0.327591091 : f32
    %81 = vector.broadcast %cst_55 : f32 to vector<4x8x128xf32>
    %82 = arith.mulf %81, %80 : vector<4x8x128xf32>
    %cst_56 = arith.constant 1.000000e+00 : f32
    %83 = vector.broadcast %cst_56 : f32 to vector<4x8x128xf32>
    %84 = arith.addf %83, %82 : vector<4x8x128xf32>
    %85 = tpu.reciprocal %84 {approx = true} : vector<4x8x128xf32> -> vector<4x8x128xf32>
    %86 = arith.mulf %84, %85 : vector<4x8x128xf32>
    %cst_57 = arith.constant 2.000000e+00 : f32
    %87 = vector.broadcast %cst_57 : f32 to vector<4x8x128xf32>
    %88 = arith.subf %87, %86 : vector<4x8x128xf32>
    %89 = arith.mulf %85, %88 : vector<4x8x128xf32>
    %cst_58 = arith.constant 1.06140542 : f32
    %90 = vector.broadcast %cst_58 : f32 to vector<4x8x128xf32>
    %91 = arith.mulf %90, %89 : vector<4x8x128xf32>
    %cst_59 = arith.constant -1.45315206 : f32
    %92 = vector.broadcast %cst_59 : f32 to vector<4x8x128xf32>
    %93 = arith.addf %91, %92 : vector<4x8x128xf32>
    %94 = arith.mulf %93, %89 : vector<4x8x128xf32>
    %cst_60 = arith.constant 1.42141378 : f32
    %95 = vector.broadcast %cst_60 : f32 to vector<4x8x128xf32>
    %96 = arith.addf %94, %95 : vector<4x8x128xf32>
    %97 = arith.mulf %96, %89 : vector<4x8x128xf32>
    %cst_61 = arith.constant -0.284496725 : f32
    %98 = vector.broadcast %cst_61 : f32 to vector<4x8x128xf32>
    %99 = arith.addf %97, %98 : vector<4x8x128xf32>
    %100 = arith.mulf %99, %89 : vector<4x8x128xf32>
    %cst_62 = arith.constant 0.254829586 : f32
    %101 = vector.broadcast %cst_62 : f32 to vector<4x8x128xf32>
    %102 = arith.addf %100, %101 : vector<4x8x128xf32>
    %103 = arith.mulf %102, %89 : vector<4x8x128xf32>
    %cst_63 = arith.constant 0.000000e+00 : f32
    %104 = vector.broadcast %cst_63 : f32 to vector<4x8x128xf32>
    %105 = arith.subf %104, %80 : vector<4x8x128xf32>
    %106 = arith.mulf %105, %80 : vector<4x8x128xf32>
    %107 = math.exp %106 : vector<4x8x128xf32>
    %108 = arith.mulf %103, %107 : vector<4x8x128xf32>
    %cst_64 = arith.constant 1.000000e+00 : f32
    %109 = vector.broadcast %cst_64 : f32 to vector<4x8x128xf32>
    %110 = arith.subf %109, %108 : vector<4x8x128xf32>
    %cst_65 = arith.constant 0.000000e+00 : f32
    %111 = vector.broadcast %cst_65 : f32 to vector<4x8x128xf32>
    %112 = arith.cmpf olt, %79, %111 : vector<4x8x128xf32>
    %cst_66 = arith.constant 0.000000e+00 : f32
    %113 = vector.broadcast %cst_66 : f32 to vector<4x8x128xf32>
    %114 = arith.subf %113, %110 : vector<4x8x128xf32>
    %115 = arith.select %112, %114, %110 : vector<4x8x128xi1>, vector<4x8x128xf32>
    %cst_67 = arith.constant 1.000000e+00 : f32
    %116 = vector.broadcast %cst_67 : f32 to vector<4x8x128xf32>
    %117 = arith.addf %116, %115 : vector<4x8x128xf32>
    %118 = arith.mulf %77, %117 : vector<4x8x128xf32>
    %c0_68 = arith.constant 0 : index
    %c0_69 = arith.constant 0 : index
    %c0_70 = arith.constant 0 : index
    %c0_71 = arith.constant 0 : index
    %119 = vector.load %arg5[%c0_68, %c0_69, %c0_70, %c0_71] : memref<1x4x8x128xf32, #tpu.memory_space<vmem>>, vector<1x4x8x128xf32>
    %120 = vector.shape_cast %119 : vector<1x4x8x128xf32> to vector<4x8x128xf32>
    %121 = vector.shape_cast %118 : vector<4x8x128xf32> to vector<1x4x8x128xf32>
    tpu.vector_store %arg5[%c0_68, %c0_69, %c0_70, %c0_71], %121 {strides = array<i32>} : memref<1x4x8x128xf32, #tpu.memory_space<vmem>>, vector<1x4x8x128xf32>,
    return
  }
  func.func @transform_0(%arg0: i32, %arg1: i32) -> (i32, i32, i32, i32, i32) {
    %c0_i32 = arith.constant 0 : i32
    %c0_i32_0 = arith.constant 0 : i32
    %c0_i32_1 = arith.constant 0 : i32
    %c0_i32_2 = arith.constant 0 : i32
    return %arg0, %arg1, %c0_i32, %c0_i32_0, %c0_i32_1 : i32, i32, i32, i32, i32
  }
  func.func @transform_1(%arg0: i32, %arg1: i32) -> (i32, i32) {
    %c0_i32 = arith.constant 0 : i32
    %c0_i32_0 = arith.constant 0 : i32
    %c0_i32_1 = arith.constant 0 : i32
    return %c0_i32, %c0_i32_0 : i32, i32
  }
  func.func @transform_2(%arg0: i32, %arg1: i32) -> (i32, i32) {
    %c0_i32 = arith.constant 0 : i32
    %c0_i32_0 = arith.constant 0 : i32
    %c0_i32_1 = arith.constant 0 : i32
    return %c0_i32, %c0_i32_0 : i32, i32
  }
  func.func @transform_3(%arg0: i32, %arg1: i32) -> (i32, i32, i32, i32) {
    %c0_i32 = arith.constant 0 : i32
    %c0_i32_0 = arith.constant 0 : i32
    %c0_i32_1 = arith.constant 0 : i32
    return %arg0, %arg1, %c0_i32, %c0_i32_0 : i32, i32, i32, i32
  }
}

</mosaic_0001>

<llo_original>
// kernel: tpu_custom_call.1
$region0: #{tpu_custom_call.1}
  #allocation0 [shape = 'u32[]', space=smem, size = 0x4, offset = 0x4, fixed_abs, tag = 'smem constant byte address 0x4 - core index']
  #allocation1 [shape = 'u32[144,128]{1,0:T(1,128)}', space=vmem, size = 0x12000, scoped, tag = 'internal scratch']
  %s0 = inlined_call_operand.vmem [shape: f32[2,2,20,9,128], index: 0, kind: input, shape index: {}]
  %s1 = inlined_call_operand.vmem [shape: f32[9,128], index: 1, kind: input, shape index: {}]
  %s2 = inlined_call_operand.vmem [shape: f32[1,128], index: 2, kind: input, shape index: {}]
  %s3 = inlined_call_operand.hbm [shape: f32[2,8,8,128], index: 3, kind: output, shape index: {}]
  %s4 = sld [smem:[#allocation0]]
  $region45: #{tpu_custom_call.1} parent=0
    _
  %s6 = ssub.s32 1, %s4
  %s7 = scalar_select 0, %s6, %s4
  $region1: #{tpu_custom_call.1} parent=0
    #allocation2 [shape = 'u8[32768]{0}', space=vmem, size = 0x8000, scoped, tag = 'output window, operand 0']
    #allocation3 [shape = 's32[2]{0}', space=sflag, size = 0x8, scoped, tag = 'scoped memory for tpu_custom_call.1']
    %8 = vsyncpa [#allocation3], 0
    %s9 = scalar_lea.sflag [#allocation3], 1
    %10 = vsyncpa %s9, 0
    loop: start=0, step=1, limit=6
    $region2: #{tpu_custom_call.1} parent=1 // loop_pre_header
      _
    $region3: #{tpu_custom_call.1} parent=1 // loop_header
      %s12 = sphi 0, %s16
      %p13 = scmp.ge.s32.totalorder %s12, 6
      %s19 = sphi 0, %s31
      %s20 = sphi 0, %s27
      %s21 = sphi 0, %s19
      %s22 = sphi 0, %s20
      %s23 = sphi 0, %s21
      %s24 = sphi 0, %s22
      %s36 = sphi 0, %s38
      %s39 = sphi 0, %s36
      %s40 = sphi 0, %s39
      %s56 = sphi 0, %s40
      %s60 = sphi 0, %s60
      %s62 = sphi 0, %s60
      %s63 = sphi 0, %s62
      %s77 = sphi 0, %s63
      %s81 = sphi 0, %s81
      %s83 = sphi 0, %s81
      %s84 = sphi 0, %s83
      %s98 = sphi 0, %s84
      %s106 = sphi 0, %s108
      %s109 = sphi 0, %s106
      %s110 = sphi 0, %s109
      %s126 = sphi 0, %s110
    $region4: #{tpu_custom_call.1} parent=1 // loop_header_branch
      %15 = sbr.rel (%p13) target = $region8
    $region5: #{tpu_custom_call.1} parent=1 // loop_body
      %s17 = ssub.s32 %s12, 1
      %s18 = ssub.s32 %s12, 2
      %s25 = sadd.s32 1, %s20
      %p26 = scmp.ge.s32.totalorder %s25, 2
      %s27 = scalar_select %p26, 0, %s25
      %s28 = sadd.s32 1, %s19
      %s29 = scalar_select %p26, %s28, %s19
      %p30 = scmp.ge.s32.totalorder %s29, 2
      %s31 = scalar_select %p30, 0, %s29
      %s32 = ssub.s32 %s19, %s31
      %s33 = ssub.s32 %s20, %s27
      %s34 = sor.u32 %s32, %s33
      %p35 = scmp.eq.s32.totalorder %s34, 0
      %s37 = sadd.s32 %s36, 1
      %s38 = scalar_select %p35, %s36, %s37
      %p41 = pneg %p35
      %p42 = scmp.eq.s32.totalorder %s12, 3
      %p43 = por %p41, %p42
      %p44 = scmp.ne.s32.totalorder %s36, %s39
      %p45 = scmp.eq.s32.totalorder %s12, 0
      %p46 = por %p44, %p45
      %p47 = scmp.ne.s32.totalorder %s36, %s39
      %p48 = scmp.eq.s32.totalorder %s17, 3
      %p49 = por %p47, %p48
      %p50 = scmp.ne.s32.totalorder %s39, %s40
      %p51 = scmp.eq.s32.totalorder %s17, 0
      %p52 = por %p50, %p51
      %p53 = scmp.ne.s32.totalorder %s39, %s40
      %p54 = scmp.eq.s32.totalorder %s18, 3
      %p55 = por %p53, %p54
      %p57 = scmp.ne.s32.totalorder %s40, %s56
      %p58 = scmp.eq.s32.totalorder %s18, 0
      %p59 = por %p57, %p58
      %s61 = sadd.s32 %s60, 1
      %p64 = scmp.eq.s32.totalorder %s12, 3
      %p65 = scmp.ne.s32.totalorder %s60, %s62
      %p66 = scmp.eq.s32.totalorder %s12, 0
      %p67 = por %p65, %p66
      %p68 = scmp.ne.s32.totalorder %s60, %s62
      %p69 = scmp.eq.s32.totalorder %s17, 3
      %p70 = por %p68, %p69
      %p71 = scmp.ne.s32.totalorder %s62, %s63
      %p72 = scmp.eq.s32.totalorder %s17, 0
      %p73 = por %p71, %p72
      %p74 = scmp.ne.s32.totalorder %s62, %s63
      %p75 = scmp.eq.s32.totalorder %s18, 3
      %p76 = por %p74, %p75
      %p78 = scmp.ne.s32.totalorder %s63, %s77
      %p79 = scmp.eq.s32.totalorder %s18, 0
      %p80 = por %p78, %p79
      %s82 = sadd.s32 %s81, 1
      %p85 = scmp.eq.s32.totalorder %s12, 3
      %p86 = scmp.ne.s32.totalorder %s81, %s83
      %p87 = scmp.eq.s32.totalorder %s12, 0
      %p88 = por %p86, %p87
      %p89 = scmp.ne.s32.totalorder %s81, %s83
      %p90 = scmp.eq.s32.totalorder %s17, 3
      %p91 = por %p89, %p90
      %p92 = scmp.ne.s32.totalorder %s83, %s84
      %p93 = scmp.eq.s32.totalorder %s17, 0
      %p94 = por %p92, %p93
      %p95 = scmp.ne.s32.totalorder %s83, %s84
      %p96 = scmp.eq.s32.totalorder %s18, 3
      %p97 = por %p95, %p96
      %p99 = scmp.ne.s32.totalorder %s84, %s98
      %p100 = scmp.eq.s32.totalorder %s18, 0
      %p101 = por %p99, %p100
      %s102 = ssub.s32 %s19, %s31
      %s103 = ssub.s32 %s20, %s27
      %s104 = sor.u32 %s102, %s103
      %p105 = scmp.eq.s32.totalorder %s104, 0
      %s107 = sadd.s32 %s106, 1
      %s108 = scalar_select %p105, %s106, %s107
      %p111 = pneg %p105
      %p112 = scmp.eq.s32.totalorder %s12, 3
      %p113 = por %p111, %p112
      %p114 = scmp.ne.s32.totalorder %s106, %s109
      %p115 = scmp.eq.s32.totalorder %s12, 0
      %p116 = por %p114, %p115
      %p117 = scmp.ne.s32.totalorder %s106, %s109
      %p118 = scmp.eq.s32.totalorder %s17, 3
      %p119 = por %p117, %p118
      %p120 = scmp.ne.s32.totalorder %s109, %s110
      %p121 = scmp.eq.s32.totalorder %s17, 0
      %p122 = por %p120, %p121
      %p123 = scmp.ne.s32.totalorder %s109, %s110
      %p124 = scmp.eq.s32.totalorder %s18, 3
      %p125 = por %p123, %p124
      %p127 = scmp.ne.s32.totalorder %s110, %s126
      %p128 = scmp.eq.s32.totalorder %s18, 0
      %p129 = por %p127, %p128
      %p130 = scmp.le.s32.totalorder 1, %s12
      %p131 = scmp.lt.s32.totalorder %s12, 5
      %p132 = pnand %p130, %p131
      %p133 = pneg %p132
      // Predicated region
      $region9: #{tpu_custom_call.1} parent=5 // pred_check
        _
      $region10: #{tpu_custom_call.1} parent=5 // pred_check_branch
        %135 = sbr.rel (%p132) target = $region12
      $region11: #{tpu_custom_call.1} parent=5 // pred_region
        %s136 = ssub.s32 %s12, 1
        // Predicated region
        $region13: #{tpu_custom_call.1} parent=11 // pred_check
          %p137 = pneg %p73
        $region14: #{tpu_custom_call.1} parent=11 // pred_check_branch
          %139 = sbr.rel (%p137) target = $region16
        $region15: #{tpu_custom_call.1} parent=11 // pred_region
          _
        $region16: #{tpu_custom_call.1} parent=11 // pred_fallthru
          _
        // Predicated region
        $region17: #{tpu_custom_call.1} parent=11 // pred_check
          %p140 = pneg %p94
        $region18: #{tpu_custom_call.1} parent=11 // pred_check_branch
          %142 = sbr.rel (%p140) target = $region20
        $region19: #{tpu_custom_call.1} parent=11 // pred_region
          _
        $region20: #{tpu_custom_call.1} parent=11 // pred_fallthru
          _
      $region12: #{tpu_custom_call.1} parent=5 // pred_fallthru
        _
      %p143 = scmp.lt.s32.totalorder %s12, 4
      // Predicated region
      $region21: #{tpu_custom_call.1} parent=5 // pred_check
        %p144 = pneg %p143
      $region22: #{tpu_custom_call.1} parent=5 // pred_check_branch
        %146 = sbr.rel (%p144) target = $region24
      $region23: #{tpu_custom_call.1} parent=5 // pred_region
        // Predicated region
        $region25: #{tpu_custom_call.1} parent=23 // pred_check
          %p147 = pneg %p46
        $region26: #{tpu_custom_call.1} parent=23 // pred_check_branch
          %149 = sbr.rel (%p147) target = $region28
        $region27: #{tpu_custom_call.1} parent=23 // pred_region
          %p150 = scmp.lt.s32.totalorder %s19, 1
          %s151 = scalar_select %p150, %s19, 1
          %p152 = scmp.lt.s32.totalorder %s20, 1
          %s153 = scalar_select %p152, %s20, 1
          %s154 = smul.addr %s153, 40
          %s155 = smul.addr %s151, 80
          %s156 = sadd.s32 %s154, %s155
          %s157 = smul.addr %s156, 8
          %s158 = scalar_lea.vmem %s0, %s157
        $region28: #{tpu_custom_call.1} parent=23 // pred_fallthru
          _
      $region24: #{tpu_custom_call.1} parent=5 // pred_fallthru
        _
      %p159 = scmp.le.s32.totalorder 1, %s12
      %p160 = scmp.lt.s32.totalorder %s12, 5
      %p161 = pnand %p159, %p160
      %p162 = pneg %p161
      // Predicated region
      $region29: #{tpu_custom_call.1} parent=5 // pred_check
        _
      $region30: #{tpu_custom_call.1} parent=5 // pred_check_branch
        %164 = sbr.rel (%p161) target = $region32
      $region31: #{tpu_custom_call.1} parent=5 // pred_region
        %s165 = ssub.s32 %s12, 1
        %p166 = scmp.lt.s32.totalorder %s21, 1
        %s167 = scalar_select %p166, %s21, 1
        %p168 = scmp.lt.s32.totalorder %s22, 1
        %s169 = scalar_select %p168, %s22, 1
        %s170 = smul.addr %s169, 40
        %s171 = smul.addr %s167, 80
        %s172 = sadd.s32 %s170, %s171
        %s173 = smul.addr %s172, 8
        %s174 = scalar_lea.vmem %s0, %s173
        %p175 = pneg %p52
        %p176 = pneg %p49
        %p177 = pneg %p73
        %p178 = pneg %p70
        %p179 = pneg %p94
        %p180 = pneg %p91
        %p181 = pneg %p122
        %p182 = pneg %p119
        %s183 = sand.u32 %s109, 1
        %s184 = scalar_lea.sflag [#allocation3], %s183
        %s185 = sand.u32 %s109, 1
        %s186 = smul.addr %s185, 32
        %s187 = scalar_lea.vmem [#allocation2], %s186
        %p188 = scmp.lt.s32.totalorder %s21, 1
        %s189 = scalar_select %p188, %s21, 1
        %p190 = scmp.lt.s32.totalorder %s22, 1
        %s191 = scalar_select %p190, %s22, 1
        %s192 = smul.addr %s191, 40
        %s193 = smul.addr %s189, 80
        %s194 = sadd.s32 %s192, %s193
        %s195 = smul.addr %s194, 8
        %s196 = scalar_lea.vmem %s0, %s195
        %s197 = smul.u32 4, %s22
        %v198 = vld [vmem:[%s196] sm:$0xff]
        %v199 = vld [vmem:[%s196 + $0x10] sm:$0xff]
        %v200 = vld [vmem:[%s196 + $0x20] sm:$0xff]
        %v201 = vld [vmem:[%s196 + $0x30] sm:$0xff]
        %v202 = vld [vmem:[%s1] sm:$0x1]
        %v203 = vlaneseq
        %v204 = vshrl.u32 %v203, 7
        %v205 = vsub.s32 0, %v204
        %v206 = vrot.slane %v202, %v205
        %v207 = vmul.f32 %v198, %v206
        %v208 = vmul.f32 %v199, %v206
        %v209 = vmul.f32 %v200, %v206
        %v210 = vmul.f32 %v201, %v206
        %s211 = scalar_lea.vmem %s196, 80
        %v212 = vld [vmem:[%s211] sm:$0xff]
        %v213 = vld [vmem:[%s211 + $0x10] sm:$0xff]
        %v214 = vld [vmem:[%s211 + $0x20] sm:$0xff]
        %v215 = vld [vmem:[%s211 + $0x30] sm:$0xff]
        %v216 = vld [vmem:[%s1 + $0x1] sm:$0x1]
        %v217 = vlaneseq
        %v218 = vshrl.u32 %v217, 7
        %v219 = vsub.s32 0, %v218
        %v220 = vrot.slane %v216, %v219
        %v221 = vmul.f32 %v212, %v220
        %v222 = vmul.f32 %v213, %v220
        %v223 = vmul.f32 %v214, %v220
        %v224 = vmul.f32 %v215, %v220
        %v225 = vadd.f32 %v207, %v221
        %v226 = vadd.f32 %v208, %v222
        %v227 = vadd.f32 %v209, %v223
        %v228 = vadd.f32 %v210, %v224
        %v229 = vld [vmem:[%s196 + $0x1] sm:$0xff]
        %v230 = vld [vmem:[%s196 + $0x11] sm:$0xff]
        %v231 = vld [vmem:[%s196 + $0x21] sm:$0xff]
        %v232 = vld [vmem:[%s196 + $0x31] sm:$0xff]
        %v233 = vld [vmem:[%s1 + $0x2] sm:$0x1]
        %v234 = vlaneseq
        %v235 = vshrl.u32 %v234, 7
        %v236 = vsub.s32 0, %v235
        %v237 = vrot.slane %v233, %v236
        %v238 = vmul.f32 %v229, %v237
        %v239 = vmul.f32 %v230, %v237
        %v240 = vmul.f32 %v231, %v237
        %v241 = vmul.f32 %v232, %v237
        %v242 = vadd.f32 %v225, %v238
        %v243 = vadd.f32 %v226, %v239
        %v244 = vadd.f32 %v227, %v240
        %v245 = vadd.f32 %v228, %v241
        %s246 = scalar_lea.vmem %s196, 160
        %v247 = vld [vmem:[%s246] sm:$0xff]
        %v248 = vld [vmem:[%s246 + $0x10] sm:$0xff]
        %v249 = vld [vmem:[%s246 + $0x20] sm:$0xff]
        %v250 = vld [vmem:[%s246 + $0x30] sm:$0xff]
        %v251 = vld [vmem:[%s1 + $0x3] sm:$0x1]
        %v252 = vlaneseq
        %v253 = vshrl.u32 %v252, 7
        %v254 = vsub.s32 0, %v253
        %v255 = vrot.slane %v251, %v254
        %v256 = vmul.f32 %v247, %v255
        %v257 = vmul.f32 %v248, %v255
        %v258 = vmul.f32 %v249, %v255
        %v259 = vmul.f32 %v250, %v255
        %v260 = vadd.f32 %v242, %v256
        %v261 = vadd.f32 %v243, %v257
        %v262 = vadd.f32 %v244, %v258
        %v263 = vadd.f32 %v245, %v259
        %s264 = scalar_lea.vmem %s196, 240
        %v265 = vld [vmem:[%s264] sm:$0xff]
        %v266 = vld [vmem:[%s264 + $0x10] sm:$0xff]
        %v267 = vld [vmem:[%s264 + $0x20] sm:$0xff]
        %v268 = vld [vmem:[%s264 + $0x30] sm:$0xff]
        %v269 = vld [vmem:[%s1 + $0x4] sm:$0x1]
        %v270 = vlaneseq
        %v271 = vshrl.u32 %v270, 7
        %v272 = vsub.s32 0, %v271
        %v273 = vrot.slane %v269, %v272
        %v274 = vmul.f32 %v265, %v273
        %v275 = vmul.f32 %v266, %v273
        %v276 = vmul.f32 %v267, %v273
        %v277 = vmul.f32 %v268, %v273
        %v278 = vadd.f32 %v260, %v274
        %v279 = vadd.f32 %v261, %v275
        %v280 = vadd.f32 %v262, %v276
        %v281 = vadd.f32 %v263, %v277
        %v282 = vld [vmem:[%s246 + $0x1] sm:$0xff]
        %v283 = vld [vmem:[%s246 + $0x11] sm:$0xff]
        %v284 = vld [vmem:[%s246 + $0x21] sm:$0xff]
        %v285 = vld [vmem:[%s246 + $0x31] sm:$0xff]
        %v286 = vld [vmem:[%s1 + $0x5] sm:$0x1]
        %v287 = vlaneseq
        %v288 = vshrl.u32 %v287, 7
        %v289 = vsub.s32 0, %v288
        %v290 = vrot.slane %v286, %v289
        %v291 = vmul.f32 %v282, %v290
        %v292 = vmul.f32 %v283, %v290
        %v293 = vmul.f32 %v284, %v290
        %v294 = vmul.f32 %v285, %v290
        %v295 = vadd.f32 %v278, %v291
        %v296 = vadd.f32 %v279, %v292
        %v297 = vadd.f32 %v280, %v293
        %v298 = vadd.f32 %v281, %v294
        %s299 = scalar_lea.vmem %s196, 16
        %v300 = vld [vmem:[%s299] sm:$0xff]
        %v301 = vld [vmem:[%s299 + $0x10] sm:$0xff]
        %v302 = vld [vmem:[%s299 + $0x20] sm:$0xff]
        %v303 = vld [vmem:[%s299 + $0x30] sm:$0xff]
        %v304 = vld [vmem:[%s1 + $0x6] sm:$0x1]
        %v305 = vlaneseq
        %v306 = vshrl.u32 %v305, 7
        %v307 = vsub.s32 0, %v306
        %v308 = vrot.slane %v304, %v307
        %v309 = vmul.f32 %v300, %v308
        %v310 = vmul.f32 %v301, %v308
        %v311 = vmul.f32 %v302, %v308
        %v312 = vmul.f32 %v303, %v308
        %v313 = vadd.f32 %v295, %v309
        %v314 = vadd.f32 %v296, %v310
        %v315 = vadd.f32 %v297, %v311
        %v316 = vadd.f32 %v298, %v312
        %s317 = scalar_lea.vmem %s196, 96
        %v318 = vld [vmem:[%s317] sm:$0xff]
        %v319 = vld [vmem:[%s317 + $0x10] sm:$0xff]
        %v320 = vld [vmem:[%s317 + $0x20] sm:$0xff]
        %v321 = vld [vmem:[%s317 + $0x30] sm:$0xff]
        %v322 = vld [vmem:[%s1 + $0x7] sm:$0x1]
        %v323 = vlaneseq
        %v324 = vshrl.u32 %v323, 7
        %v325 = vsub.s32 0, %v324
        %v326 = vrot.slane %v322, %v325
        %v327 = vmul.f32 %v318, %v326
        %v328 = vmul.f32 %v319, %v326
        %v329 = vmul.f32 %v320, %v326
        %v330 = vmul.f32 %v321, %v326
        %v331 = vadd.f32 %v313, %v327
        %v332 = vadd.f32 %v314, %v328
        %v333 = vadd.f32 %v315, %v329
        %v334 = vadd.f32 %v316, %v330
        %v335 = vld [vmem:[%s299 + $0x1] sm:$0xff]
        %v336 = vld [vmem:[%s299 + $0x11] sm:$0xff]
        %v337 = vld [vmem:[%s299 + $0x21] sm:$0xff]
        %v338 = vld [vmem:[%s299 + $0x31] sm:$0xff]
        %v339 = vld [vmem:[%s1 + $0x8] sm:$0x1]
        %v340 = vlaneseq
        %v341 = vshrl.u32 %v340, 7
        %v342 = vsub.s32 0, %v341
        %v343 = vrot.slane %v339, %v342
        %v344 = vmul.f32 %v335, %v343
        %v345 = vmul.f32 %v336, %v343
        %v346 = vmul.f32 %v337, %v343
        %v347 = vmul.f32 %v338, %v343
        %v348 = vadd.f32 %v331, %v344
        %v349 = vadd.f32 %v332, %v345
        %v350 = vadd.f32 %v333, %v346
        %v351 = vadd.f32 %v334, %v347
        %v352 = vld [vmem:[%s2] sm:$0x1]
        %v354 = vlaneseq
        %v355 = vshrl.u32 %v354, 7
        %v356 = vsub.s32 0, %v355
        %v357 = vrot.slane %v352, %v356
        %v359 = vadd.f32 %v348, %v357
        %v360 = vadd.f32 %v349, %v357
        %v361 = vadd.f32 %v350, %v357
        %v362 = vadd.f32 %v351, %v357
        %v363 = vmul.f32 %v359, 0.5
        %v364 = vmul.f32 %v360, 0.5
        %v365 = vmul.f32 %v361, 0.5
        %v366 = vmul.f32 %v362, 0.5
        %v367 = vmul.f32 %v359, 0.70710677
        %v368 = vmul.f32 %v360, 0.70710677
        %v369 = vmul.f32 %v361, 0.70710677
        %v370 = vmul.f32 %v362, 0.70710677
        %v371 = vand.u32 2147483647, %v367
        %v372 = vand.u32 2147483647, %v368
        %v373 = vand.u32 2147483647, %v369
        %v374 = vand.u32 2147483647, %v370
        %v375 = vmul.f32 %v371, 0.3275911
        %v376 = vmul.f32 %v372, 0.3275911
        %v377 = vmul.f32 %v373, 0.3275911
        %v378 = vmul.f32 %v374, 0.3275911
        %v379 = vadd.f32 %v375, 1.0
        %v380 = vadd.f32 %v376, 1.0
        %v381 = vadd.f32 %v377, 1.0
        %v382 = vadd.f32 %v378, 1.0
        %v383 = vrcp.pop %v379
        %v384 = vrcp.pop %v380
        %v385 = vrcp.pop %v381
        %v386 = vrcp.pop %v382
        %v387 = vmul.f32 %v379, %v383
        %v388 = vmul.f32 %v380, %v384
        %v389 = vmul.f32 %v381, %v385
        %v390 = vmul.f32 %v382, %v386
        %v391 = vsub.f32 2.0, %v387
        %v392 = vsub.f32 2.0, %v388
        %v393 = vsub.f32 2.0, %v389
        %v394 = vsub.f32 2.0, %v390
        %v395 = vmul.f32 %v383, %v391
        %v396 = vmul.f32 %v384, %v392
        %v397 = vmul.f32 %v385, %v393
        %v398 = vmul.f32 %v386, %v394
        %v399 = vmul.f32 %v395, 1.0614054
        %v400 = vmul.f32 %v396, 1.0614054
        %v401 = vmul.f32 %v397, 1.0614054
        %v402 = vmul.f32 %v398, 1.0614054
        %v403 = vadd.f32 %v399, -1.4531521
        %v404 = vadd.f32 %v400, -1.4531521
        %v405 = vadd.f32 %v401, -1.4531521
        %v406 = vadd.f32 %v402, -1.4531521
        %v407 = vmul.f32 %v403, %v395
        %v408 = vmul.f32 %v404, %v396
        %v409 = vmul.f32 %v405, %v397
        %v410 = vmul.f32 %v406, %v398
        %v411 = vadd.f32 %v407, 1.4214138
        %v412 = vadd.f32 %v408, 1.4214138
        %v413 = vadd.f32 %v409, 1.4214138
        %v414 = vadd.f32 %v410, 1.4214138
        %v415 = vmul.f32 %v411, %v395
        %v416 = vmul.f32 %v412, %v396
        %v417 = vmul.f32 %v413, %v397
        %v418 = vmul.f32 %v414, %v398
        %v419 = vadd.f32 %v415, -0.28449672
        %v420 = vadd.f32 %v416, -0.28449672
        %v421 = vadd.f32 %v417, -0.28449672
        %v422 = vadd.f32 %v418, -0.28449672
        %v423 = vmul.f32 %v419, %v395
        %v424 = vmul.f32 %v420, %v396
        %v425 = vmul.f32 %v421, %v397
        %v426 = vmul.f32 %v422, %v398
        %v427 = vadd.f32 %v423, 0.2548296
        %v428 = vadd.f32 %v424, 0.2548296
        %v429 = vadd.f32 %v425, 0.2548296
        %v430 = vadd.f32 %v426, 0.2548296
        %v431 = vmul.f32 %v427, %v395
        %v432 = vmul.f32 %v428, %v396
        %v433 = vmul.f32 %v429, %v397
        %v434 = vmul.f32 %v430, %v398
        %v435 = vsub.f32 0.0, %v371
        %v436 = vsub.f32 0.0, %v372
        %v437 = vsub.f32 0.0, %v373
        %v438 = vsub.f32 0.0, %v374
        %v439 = vmul.f32 %v435, %v371
        %v440 = vmul.f32 %v436, %v372
        %v441 = vmul.f32 %v437, %v373
        %v442 = vmul.f32 %v438, %v374
        %v443 = vmul.f32 %v439, 1.442695
        %v444 = vpow.pop %v443
        %v445 = vmul.f32 %v440, 1.442695
        %v446 = vpow.pop %v445
        %v447 = vmul.f32 %v441, 1.442695
        %v448 = vpow.pop %v447
        %v449 = vmul.f32 %v442, 1.442695
        %v450 = vpow.pop %v449
        %v451 = vmul.f32 %v431, %v444
        %v452 = vmul.f32 %v432, %v446
        %v453 = vmul.f32 %v433, %v448
        %v454 = vmul.f32 %v434, %v450
        %v455 = vsub.f32 1.0, %v451
        %v456 = vsub.f32 1.0, %v452
        %v457 = vsub.f32 1.0, %v453
        %v458 = vsub.f32 1.0, %v454
        %vm459 = vcmp.lt.f32.partialorder %v367, 0.0
        %vm460 = vcmp.lt.f32.partialorder %v368, 0.0
        %vm461 = vcmp.lt.f32.partialorder %v369, 0.0
        %vm462 = vcmp.lt.f32.partialorder %v370, 0.0
        %v463 = vsub.f32 0.0, %v455
        %v464 = vsub.f32 0.0, %v456
        %v465 = vsub.f32 0.0, %v457
        %v466 = vsub.f32 0.0, %v458
        %v467 = vsel %vm459, %v463, %v455
        %v468 = vsel %vm460, %v464, %v456
        %v469 = vsel %vm461, %v465, %v457
        %v470 = vsel %vm462, %v466, %v458
        %v471 = vadd.f32 %v467, 1.0
        %v472 = vadd.f32 %v468, 1.0
        %v473 = vadd.f32 %v469, 1.0
        %v474 = vadd.f32 %v470, 1.0
        %v475 = vmul.f32 %v363, %v471
        %v476 = vmul.f32 %v364, %v472
        %v477 = vmul.f32 %v365, %v473
        %v478 = vmul.f32 %v366, %v474
        %479 = vst [vmem:[%s187] sm:$0xff] %v475
        %480 = vst [vmem:[%s187 + $0x8] sm:$0xff] %v476
        %481 = vst [vmem:[%s187 + $0x10] sm:$0xff] %v477
        %482 = vst [vmem:[%s187 + $0x18] sm:$0xff] %v478
        %s483 = sand.u32 %s109, 1
        %s484 = scalar_lea.sflag [#allocation3], %s483
        %s485 = sand.u32 %s109, 1
        %s486 = smul.addr %s485, 32
        %s487 = scalar_lea.vmem [#allocation2], %s486
        // Predicated region
        $region33: #{tpu_custom_call.1} parent=31 // pred_check
          %p488 = pneg %p119
        $region34: #{tpu_custom_call.1} parent=31 // pred_check_branch
          %490 = sbr.rel (%p488) target = $region36
        $region35: #{tpu_custom_call.1} parent=31 // pred_region
          %s491 = smul.u32 4, %s22
          %s493 = ssub.s32 512, 512
          %494 = vsyncadd %s484, %s493
          %s495 = smul.addr %s21, 8
          %s496 = sadd.s32 %s491, %s495
          %s497 = smul.addr %s496, 128
          %s498 = scalar_lea.hbm %s3, %s497
          %s499 = sshll.u32 %s487, 4
          %s500 = int_to_ptr.vmem [resolvable:$true] %s499
          %505 = dma.vmem_to_hbm [thread:$0]  %s500, 512, %s498, %s484, 128, 128, 8
        $region36: #{tpu_custom_call.1} parent=31 // pred_fallthru
          _
      $region32: #{tpu_custom_call.1} parent=5 // pred_fallthru
        _
      %p506 = scmp.le.s32.totalorder 2, %s12
      // Predicated region
      $region37: #{tpu_custom_call.1} parent=5 // pred_check
        %p507 = pneg %p506
      $region38: #{tpu_custom_call.1} parent=5 // pred_check_branch
        %509 = sbr.rel (%p507) target = $region40
      $region39: #{tpu_custom_call.1} parent=5 // pred_region
        %s510 = ssub.s32 %s12, 2
        // Predicated region
        $region41: #{tpu_custom_call.1} parent=39 // pred_check
          %p511 = pneg %p125
        $region42: #{tpu_custom_call.1} parent=39 // pred_check_branch
          %513 = sbr.rel (%p511) target = $region44
        $region43: #{tpu_custom_call.1} parent=39 // pred_region
          %s514 = sand.u32 %s110, 1
          %s515 = scalar_lea.sflag [#allocation3], %s514
          %s516 = sand.u32 %s110, 1
          %s517 = smul.addr %s516, 32
          %s518 = scalar_lea.vmem [#allocation2], %s517
          %519 = dma.done %s515, 512
        $region44: #{tpu_custom_call.1} parent=39 // pred_fallthru
          _
      $region40: #{tpu_custom_call.1} parent=5 // pred_fallthru
        _
    $region6: #{tpu_custom_call.1} parent=1 // loop_footer
      %s16 = sadd.s32 1, %s12
    $region7: #{tpu_custom_call.1} parent=1 // loop_footer_branch
      %11 = sbr.rel target = $region3
    $region8: #{tpu_custom_call.1} parent=1 // loop_exit
      _
    %520 = vsyncpa [#allocation3], 1
    %s521 = scalar_lea.sflag [#allocation3], 1
    %522 = vsyncpa %s521, 1

</llo_original>
